<compile_context>
chip_gen: v5e
topology: v5e:2x2
jax: 0.10.0
libtpu: 0.0.40
codegen_flags: <defaults>
</compile_context>

<pallas_src>
import functools

import jax
import jax.numpy as jnp
from jax.experimental import pallas as pl
from jax.experimental.pallas import tpu as pltpu


def _label_smooth_ce_kernel(x_ref, tgt_ref, o_ref, *, smoothing, n_rows, row_tile):
    """One batch tile -> per-tile sum of smoothed-CE row losses (lane-dense store)."""
    x = x_ref[...].astype(jnp.float32)          # (TN, C); upcast after DMA (bf16 ok)
    tgt = tgt_ref[...]                          # (TN, 1) int32
    tn, c = x.shape

    confidence = 1.0 - smoothing
    uniform_w = smoothing / c

    # Cross-lane (XLU) reductions per row: max, sum(exp), fused weighted sum = 3.
    # exp rides the EUP slot; per-element VPU work is ~4 ops (sub, cmp, select, mul).
    m = jnp.max(x, axis=-1, keepdims=True)                                      # (TN, 1)
    lse = m + jnp.log(jnp.sum(jnp.exp(x - m), axis=-1, keepdims=True))          # (TN, 1)

    # Fused target + uniform terms:
    #   loss = lse - sum_j (confidence*onehot_j + smoothing/C) * x_j
    class_ids = jax.lax.broadcasted_iota(jnp.int32, (tn, c), 1)
    weight = jnp.where(class_ids == tgt, confidence + uniform_w, uniform_w)     # (TN, C)
    combined = jnp.sum(weight * x, axis=-1, keepdims=True)                      # (TN, 1)
    loss = lse - combined                                                       # (TN, 1)

    # Ragged final tile: x is NOT padded in the wrapper; mask the undefined rows
    # here. jnp.where is a select, so garbage in masked rows cannot propagate.
    row0 = pl.program_id(0) * row_tile
    row_ids = row0 + jax.lax.broadcasted_iota(jnp.int32, (tn, 1), 0)
    loss = jnp.where(row_ids < n_rows, loss, 0.0)

    # Full-width (8,128) lane-dense store of the per-tile partial sum.
    o_ref[...] = jnp.broadcast_to(jnp.sum(loss), o_ref.shape)


def _choose_row_tile(n, c, itemsize):
    """Bytes-based batch-tile size with explicit VMEM accounting."""
    padded_c = ((c + 127) // 128) * 128

    # ~2 MiB of HBM traffic per x tile: amortizes the ~0.35 us per-grid-step
    # overhead (measured 85-86% HBM roofline plateau) and is safe on every
    # generation, including v7x's 64 MiB physical / 32 MiB scoped VMEM.
    target_tile_bytes = 2 * 1024 * 1024
    row_tile = max(8, target_tile_bytes // max(1, c * itemsize))

    # VMEM accounting at padded lane layout:
    #   x double-buffer: 2 * padded_C * itemsize per row
    #   f32 temporaries on the x tile (~3x):      3 * padded_C * 4 per row
    #   target block pads to 128 lanes, int32, double-buffered: 2 * 128 * 4 per row
    per_row_bytes = 2 * padded_c * itemsize + 3 * padded_c * 4 + 2 * 128 * 4
    vmem_budget = 24 * 1024 * 1024
    row_tile = min(row_tile, vmem_budget // per_row_bytes, 16384)
    row_tile = max(8, (row_tile // 8) * 8)
    row_tile = min(row_tile, ((n + 7) // 8) * 8)    # never tile past the batch

    # v7x shards the "parallel" grid axis across 2 TensorCores: for small N,
    # halve row_tile so there are >= 2 tiles instead of running num_tiles == 1.
    if n > 8 and -(-n // row_tile) < 2:
        row_tile = max(8, ((row_tile // 2 + 7) // 8) * 8)
    return row_tile


def label_smooth_ce(x, target, smoothing=0.1, row_tile=None):
    """x: (N, C) float logits; target: (N,) int labels. Returns scalar f32 mean loss."""
    n, c = x.shape
    itemsize = jnp.dtype(x.dtype).itemsize

    if row_tile is None:
        row_tile = _choose_row_tile(n, c, itemsize)
    else:
        row_tile = max(8, (int(row_tile) // 8) * 8)
        row_tile = min(row_tile, ((n + 7) // 8) * 8)

    num_tiles = pl.cdiv(n, row_tile)
    tgt2d = target.astype(jnp.int32).reshape(n, 1)

    kernel = functools.partial(
        _label_smooth_ce_kernel,
        smoothing=float(smoothing),
        n_rows=n,
        row_tile=row_tile,
    )

    # TODO(synk): for vocab-scale C, tile the class axis with an online
    # max/sum-exp (flash-softmax) carry so the tile + f32 temps fit v7x's
    # 64 MiB VMEM; here C stays full-extent on the lane axis.
    # TODO(synk): if small C (<128 / not 128-aligned) is a production shape,
    # pad the class axis to 128 lanes in the wrapper (pad cols: weight 0,
    # large-negative logit) to stop wasting 4x of lane/DMA throughput.
    partials = pl.pallas_call(
        kernel,
        out_shape=jax.ShapeDtypeStruct((num_tiles, 8, 128), jnp.float32),
        grid=(num_tiles,),
        in_specs=[
            pl.BlockSpec((row_tile, c), lambda i: (i, 0)),
            pl.BlockSpec((row_tile, 1), lambda i: (i, 0)),
        ],
        out_specs=pl.BlockSpec((1, 8, 128), lambda i: (i, 0, 0)),
        compiler_params=pltpu.CompilerParams(
            dimension_semantics=("parallel",),
            # 32 MiB scoped VMEM is safe on v5e/v6e/v7x; v5e/v6e could go to
            # 64 MiB + ~4 MiB tiles for a ~1% extra roofline win if desired.
            vmem_limit_bytes=32 * 1024 * 1024,
        ),
    )(x, tgt2d)

    # Tiny final reduction + divide by the true batch size.
    return jnp.sum(partials[:, 0, 0]) / n


def _reference(x, target, smoothing=0.1):
    logprobs = jax.nn.log_softmax(x.astype(jnp.float32), axis=-1)
    nll = -jnp.take_along_axis(logprobs, target[:, None].astype(jnp.int32), axis=-1)[:, 0]
    smooth = -jnp.mean(logprobs, axis=-1)
    return jnp.mean((1.0 - smoothing) * nll + smoothing * smooth)


if __name__ == "__main__":
    key = jax.random.PRNGKey(0)
    k1, k2, k3, k4 = jax.random.split(key, 4)

    # Case 1: single-tile path (batch=8, classes=32).
    x1 = jax.random.normal(k1, (8, 32), dtype=jnp.float32)
    t1 = jax.random.randint(k2, (8,), 0, 32, dtype=jnp.int32)
    out1 = label_smooth_ce(x1, t1, smoothing=0.1)
    jax.block_until_ready(out1)
    ref1 = _reference(x1, t1, smoothing=0.1)
    assert jnp.allclose(out1, ref1, atol=1e-5, rtol=1e-5), (out1, ref1)

    # Case 2: multi-tile grid with a ragged, unpadded final tile
    # (batch=40, tile=16 -> blocks of 16/16/8-valid rows, in-kernel row mask).
    x2 = jax.random.normal(k3, (40, 32), dtype=jnp.float32)
    t2 = jax.random.randint(k4, (40,), 0, 32, dtype=jnp.int32)
    out2 = label_smooth_ce(x2, t2, smoothing=0.1, row_tile=16)
    jax.block_until_ready(out2)
    ref2 = _reference(x2, t2, smoothing=0.1)
    assert jnp.allclose(out2, ref2, atol=1e-5, rtol=1e-5), (out2, ref2)

    # Case 3: auto row_tile on the same ragged batch (exercises the >=2-tile
    # split for v7x and the byte-based tile heuristic: row_tile=24, 2 tiles).
    out3 = label_smooth_ce(x2, t2, smoothing=0.1)
    jax.block_until_ready(out3)
    assert jnp.allclose(out3, ref2, atol=1e-5, rtol=1e-5), (out3, ref2)

    print("KERNEL_OK")
</pallas_src>

<mosaic_0001>
module attributes {stable_mosaic.version = 11 : i64} {
  func.func @_label_smooth_ce_kernel(%arg0: i32, %arg1: memref<8x32xf32, #tpu.memory_space<vmem>>, %arg2: memref<8x1xi32, #tpu.memory_space<vmem>>, %arg3: memref<1x8x128xf32, #tpu.memory_space<vmem>>) attributes {dimension_semantics = [#tpu.dimension_semantics<parallel>], iteration_bounds = array<i64: 1>, scalar_prefetch = 0 : i64, scratch_operands = 0 : i64, tpu.core_type = #tpu.core_type<tc>, window_params = [{transform_indices = @transform_0, window_bounds = array<i64: 8, 32>}, {transform_indices = @transform_1, window_bounds = array<i64: 8, 1>}, {transform_indices = @transform_2, window_bounds = array<i64: 1, 8, 128>}]} {
    %c0 = arith.constant 0 : index
    %c0_0 = arith.constant 0 : index
    %0 = vector.load %arg1[%c0, %c0_0] : memref<8x32xf32, #tpu.memory_space<vmem>>, vector<8x32xf32>
    %c0_1 = arith.constant 0 : index
    %c0_2 = arith.constant 0 : index
    %1 = vector.load %arg2[%c0_1, %c0_2] : memref<8x1xi32, #tpu.memory_space<vmem>>, vector<8x1xi32>
    %cst = arith.constant dense<0xFF800000> : vector<8xf32>
    %2 = vector.multi_reduction <maximumf>, %0, %cst [1] : vector<8x32xf32> to vector<8xf32>
    %3 = vector.shape_cast %2 : vector<8xf32> to vector<8x1xf32>
    %4 = vector.broadcast %3 : vector<8x1xf32> to vector<8x32xf32>
    %5 = arith.subf %0, %4 : vector<8x32xf32>
    %6 = math.exp %5 : vector<8x32xf32>
    %cst_3 = arith.constant dense<0.000000e+00> : vector<8xf32>
    %7 = vector.multi_reduction <add>, %6, %cst_3 [1] : vector<8x32xf32> to vector<8xf32>
    %8 = vector.shape_cast %7 : vector<8xf32> to vector<8x1xf32>
    %9 = math.log %8 : vector<8x1xf32>
    %10 = arith.addf %3, %9 : vector<8x1xf32>
    %11 = tpu.iota {dimensions = array<i32: 1>} : vector<8x32xi32>
    %12 = vector.broadcast %1 : vector<8x1xi32> to vector<8x32xi32>
    %13 = arith.cmpi eq, %11, %12 : vector<8x32xi32>
    %cst_4 = arith.constant 0.903124988 : f32
    %cst_5 = arith.constant 3.125000e-03 : f32
    %14 = vector.broadcast %cst_4 : f32 to vector<8x32xf32>
    %15 = vector.broadcast %cst_5 : f32 to vector<8x32xf32>
    %16 = arith.select %13, %14, %15 : vector<8x32xi1>, vector<8x32xf32>
    %17 = arith.mulf %16, %0 : vector<8x32xf32>
    %cst_6 = arith.constant dense<0.000000e+00> : vector<8xf32>
    %18 = vector.multi_reduction <add>, %17, %cst_6 [1] : vector<8x32xf32> to vector<8xf32>
    %19 = vector.shape_cast %18 : vector<8xf32> to vector<8x1xf32>
    %20 = arith.subf %10, %19 : vector<8x1xf32>
    %c8_i32 = arith.constant 8 : i32
    %21 = arith.muli %arg0, %c8_i32 : i32
    %22 = tpu.iota {dimensions = array<i32: 0>} : vector<8x1xi32>
    %23 = vector.broadcast %21 : i32 to vector<8x1xi32>
    %24 = arith.addi %23, %22 : vector<8x1xi32>
    %c8_i32_7 = arith.constant 8 : i32
    %25 = vector.broadcast %c8_i32_7 : i32 to vector<8x1xi32>
    %26 = arith.cmpi slt, %24, %25 : vector<8x1xi32>
    %cst_8 = arith.constant 0.000000e+00 : f32
    %27 = vector.broadcast %cst_8 : f32 to vector<8x1xf32>
    %28 = arith.select %26, %20, %27 : vector<8x1xi1>, vector<8x1xf32>
    %29 = vector.shape_cast %28 : vector<8x1xf32> to vector<1x8x1xf32>
    %cst_9 = arith.constant dense<0.000000e+00> : vector<1xf32>
    %30 = vector.multi_reduction <add>, %29, %cst_9 [1, 2] : vector<1x8x1xf32> to vector<1xf32>
    %31 = vector.shape_cast %30 : vector<1xf32> to vector<1x1x1xf32>
    %32 = vector.extract %31[0, 0, 0] : f32 from vector<1x1x1xf32>
    %33 = vector.broadcast %32 : f32 to vector<1x8x128xf32>
    %c0_10 = arith.constant 0 : index
    %c0_11 = arith.constant 0 : index
    %c0_12 = arith.constant 0 : index
    %34 = vector.load %arg3[%c0_10, %c0_11, %c0_12] : memref<1x8x128xf32, #tpu.memory_space<vmem>>, vector<1x8x128xf32>
    tpu.vector_store %arg3[%c0_10, %c0_11, %c0_12], %33 {strides = array<i32>} : memref<1x8x128xf32, #tpu.memory_space<vmem>>, vector<1x8x128xf32>,
    return
  }
  func.func @transform_0(%arg0: i32) -> (i32, i32) {
    %c0_i32 = arith.constant 0 : i32
    %c0_i32_0 = arith.constant 0 : i32
    return %arg0, %c0_i32 : i32, i32
  }
  func.func @transform_1(%arg0: i32) -> (i32, i32) {
    %c0_i32 = arith.constant 0 : i32
    %c0_i32_0 = arith.constant 0 : i32
    return %arg0, %c0_i32 : i32, i32
  }
  func.func @transform_2(%arg0: i32) -> (i32, i32, i32) {
    %c0_i32 = arith.constant 0 : i32
    %c0_i32_0 = arith.constant 0 : i32
    %c0_i32_1 = arith.constant 0 : i32
    return %arg0, %c0_i32, %c0_i32_0 : i32, i32, i32
  }
}

</mosaic_0001>

<llo_original>
// kernel: tpu_custom_call.1
$region0: #{tpu_custom_call.1}
  #allocation0 [shape = 'u32[]', space=smem, size = 0x4, offset = 0x4, fixed_abs, tag = 'smem constant byte address 0x4 - core index']
  #allocation1 [shape = 'u32[72,128]{1,0:T(1,128)}', space=vmem, size = 0x9000, scoped, tag = 'internal scratch']
  %s0 = inlined_call_operand.vmem [shape: f32[8,32], index: 0, kind: input, shape index: {}]
  %s1 = inlined_call_operand.vmem [shape: s32[8,1], index: 1, kind: input, shape index: {}]
  %s2 = inlined_call_operand.hbm [shape: f32[1,8,128], index: 2, kind: output, shape index: {}]
  %s3 = sld [smem:[#allocation0]]
  $region18: #{tpu_custom_call.1} parent=0
    _
  %s5 = ssub.s32 1, %s3
  %s6 = scalar_select 0, %s5, %s3
  $region1: #{tpu_custom_call.1} parent=0
    #allocation2 [shape = 'u8[4096]{0}', space=vmem, size = 0x1000, scoped, tag = 'output window, operand 0, single buffered']
    #allocation3 [shape = 's32[1]{0}', space=sflag, size = 0x4, scoped, tag = 'scoped memory for tpu_custom_call.1']
    %7 = vsyncpa [#allocation3], 0
    // Predicated region
    $region2: #{tpu_custom_call.1} parent=1 // pred_check
      _
    $region3: #{tpu_custom_call.1} parent=1 // pred_check_branch
      %9 = sbr.rel (0) target = $region5
    $region4: #{tpu_custom_call.1} parent=1 // pred_region
      _
    $region5: #{tpu_custom_call.1} parent=1 // pred_fallthru
      _
    // Predicated region
    $region6: #{tpu_custom_call.1} parent=1 // pred_check
      _
    $region7: #{tpu_custom_call.1} parent=1 // pred_check_branch
      %11 = sbr.rel (0) target = $region9
    $region8: #{tpu_custom_call.1} parent=1 // pred_region
      _
    $region9: #{tpu_custom_call.1} parent=1 // pred_fallthru
      _
    %v12 = vld [vmem:[%s0] sm:$0xff]
    %v13 = vld [vmem:[%s1] sm:$0xff]
    %vm14 = vcmask 261120
    %v15 = vsel %vm14, %v12, -inf
    %16 = vmax.xlane.f32.xlu0 %v15
    %v17 = vpop.xlane.xlu0 %16
    %v18 = vsub.f32 %v12, %v17
    %v19 = vmul.f32 %v18, 1.442695
    %v20 = vpow.pop %v19
    %v21 = vsel %vm14, %v20, 0.0
    %22 = vadd.xlane.f32.xlu0 %v21
    %v23 = vpop.xlane.xlu0 %22
    %v24 = vlog2.pop %v23
    %v25 = vmul.f32 %v24, 0.6931472
    %v26 = vadd.f32 %v17, %v25
    %v27 = vlaneseq
    %v28 = vand.u32 %v27, 127
    %29 = vset.pattern.permute.xlu0 0
    %30 = vperm.xlu0 %29, %v13
    %v31 = vpop.permute.xlu0 %30
    %vm32 = vcmp.eq.s32.totalorder %v28, %v31
    %v33 = vsel %vm32, 0.903125, 0.003125
    %v34 = vmul.f32 %v33, %v12
    %v35 = vsel %vm14, %v34, 0.0
    %36 = vadd.xlane.f32.xlu0 %v35
    %v37 = vpop.xlane.xlu0 %36
    %v38 = vsub.f32 %v26, %v37
    %s39 = smul.u32 0, 8
    %v40 = vlaneseq
    %v41 = vshrl.u32 %v40, 7
    %v42 = vstv %s39
    %v43 = vadd.s32 %v42, %v41
    %vm44 = vcmp.lt.s32.totalorder %v43, 8
    %v45 = vsel %vm44, %v38, 0.0
    %vm46 = vcmask 7168
    %v47 = vsel %vm46, %v45, 0.0
    %48 = vadd.xlane.f32.xlu0 %v47
    %v49 = vpop.xlane.xlu0 %48
    %v50 = vrot.slane %v49, 4
    %v51 = vadd.f32 %v49, %v50
    %v52 = vrot.slane %v51, 2
    %v53 = vadd.f32 %v51, %v52
    %v54 = vrot.slane %v53, 1
    %v55 = vadd.f32 %v53, %v54
    %s56 = vtos %v55
    %v57 = vstv %s56
    %58 = vst [vmem:[#allocation2] sm:$0xff] %v57
    // Predicated region
    $region10: #{tpu_custom_call.1} parent=1 // pred_check
      _
    $region11: #{tpu_custom_call.1} parent=1 // pred_check_branch
      %60 = sbr.rel (0) target = $region13
    $region12: #{tpu_custom_call.1} parent=1 // pred_region
      %62 = vsyncadd [#allocation3], 0
      %s64 = sshll.u32 [#allocation2], 4
      %s65 = int_to_ptr.vmem [resolvable:$true] %s64
      %s66 = sshll.u32 %s2, 4
      %s67 = int_to_ptr.hbm [resolvable:$true] %s66
      %69 = dma.vmem_to_hbm [thread:$0]  %s65, 128, %s67, [#allocation3]
    $region13: #{tpu_custom_call.1} parent=1 // pred_fallthru
      _
    // Predicated region
    $region14: #{tpu_custom_call.1} parent=1 // pred_check
      _
    $region15: #{tpu_custom_call.1} parent=1 // pred_check_branch
      %71 = sbr.rel (0) target = $region17
    $region16: #{tpu_custom_call.1} parent=1 // pred_region
      %73 = dma.done [#allocation3], 128
    $region17: #{tpu_custom_call.1} parent=1 // pred_fallthru
      _
    %74 = vsyncpa [#allocation3], 1

</llo_original>
